<compile_context>
chip_gen: v7x
topology: tpu7x:2x2x1
jax: 0.10.0
libtpu: 0.0.40
codegen_flags: <defaults>
</compile_context>

<pallas_src>
import math

import jax
import jax.numpy as jnp
from jax.experimental import pallas as pl
from jax.experimental.pallas import tpu as pltpu

LANE = 128
SUBLANE = 8


def _round_up(x, m):
    return (x + m - 1) // m * m


def _swish(h):
    # x * sigmoid(x); exp and approximate reciprocal both go to the EUP slot.
    return h * pl.reciprocal(1.0 + jnp.exp(-h), approx=True)


def _mlp_kernel(x_ref, w1_ref, b1_ref, w2_ref, b2_ref,
                w3m_ref, b3m_ref, w3l_ref, b3l_ref,
                mu_ref, lv_ref):
    x = x_ref[...]  # (TB, 2) float32 tile of the batch

    # Layer 1: K=2 contraction as two broadcast multiply-adds on the VPU.
    # (an MXU matmul would pad K to 128/256 and waste >98% of the array)
    h = (x[:, 0:1] * w1_ref[0:1, :]
         + x[:, 1:2] * w1_ref[1:2, :]
         + b1_ref[...])
    h = _swish(h)

    # Layer 2: lane-dense (Hp x Hp) matmul on the MXU, f32 accumulation.
    h = jnp.dot(h, w2_ref[...], preferred_element_type=jnp.float32) + b2_ref[...]
    h = _swish(h)

    # Layer 3: two lane-dense heads -> two lane-aligned outputs (mu, logvar).
    mu_ref[...] = (jnp.dot(h, w3m_ref[...], preferred_element_type=jnp.float32)
                   + b3m_ref[...])
    lv_ref[...] = (jnp.dot(h, w3l_ref[...], preferred_element_type=jnp.float32)
                   + b3l_ref[...])


def message_encoder_forward(x, params, n_latents, *, batch_tile=512):
    """Runs the 3-layer MLP inside one Pallas kernel.

    Weights are stored as (in_features, out_features); zero-padding the hidden
    and head dimensions to 128 lanes is exact (padded activations are
    swish(0) = 0 and padded weight rows are 0, so valid columns are unchanged).
    """
    w1, b1, w2, b2, w3, b3 = params
    H = w1.shape[1]
    half = 2 * n_latents                      # width of each of mu / logvar

    x = x.astype(jnp.float32)
    B = x.shape[0]

    # --- lane-pad feature dims to multiples of 128 --------------------------
    Hp = _round_up(H, LANE)
    Op = _round_up(half, LANE)

    w1p = jnp.pad(w1, ((0, 0), (0, Hp - H)))
    b1p = jnp.pad(b1, ((0, 0), (0, Hp - H)))
    w2p = jnp.pad(w2, ((0, Hp - H), (0, Hp - H)))
    b2p = jnp.pad(b2, ((0, 0), (0, Hp - H)))
    w3m = jnp.pad(w3[:, :half], ((0, Hp - H), (0, Op - half)))
    w3l = jnp.pad(w3[:, half:], ((0, Hp - H), (0, Op - half)))
    b3m = jnp.pad(b3[:, :half], ((0, 0), (0, Op - half)))
    b3l = jnp.pad(b3[:, half:], ((0, 0), (0, Op - half)))

    # --- batch tiling --------------------------------------------------------
    # Cap the batch tile at 512 rows: with Hp=128 f32 this keeps the per-step
    # VMEM footprint well inside v7x's 64 MiB (and the 32 MiB scoped default).
    TB = min(batch_tile, _round_up(B, SUBLANE))
    Bp = _round_up(B, TB)
    xp = jnp.pad(x, ((0, Bp - B), (0, 0)))

    grid = (Bp // TB,)
    const = lambda i: (0, 0)   # weights/biases: same block every step (resident)
    row = lambda i: (i, 0)     # batch-tiled arrays

    mu_pad, lv_pad = pl.pallas_call(
        _mlp_kernel,
        out_shape=(jax.ShapeDtypeStruct((Bp, Op), jnp.float32),
                   jax.ShapeDtypeStruct((Bp, Op), jnp.float32)),
        grid_spec=pltpu.PrefetchScalarGridSpec(
            num_scalar_prefetch=0,
            grid=grid,
            in_specs=[
                pl.BlockSpec((TB, 2), row),    # x tile
                pl.BlockSpec((2, Hp), const),  # w1
                pl.BlockSpec((1, Hp), const),  # b1
                pl.BlockSpec((Hp, Hp), const),  # w2
                pl.BlockSpec((1, Hp), const),   # b2
                pl.BlockSpec((Hp, Op), const),  # w3 (mu head)
                pl.BlockSpec((1, Op), const),   # b3 (mu head)
                pl.BlockSpec((Hp, Op), const),  # w3 (logvar head)
                pl.BlockSpec((1, Op), const),   # b3 (logvar head)
            ],
            out_specs=[pl.BlockSpec((TB, Op), row),
                       pl.BlockSpec((TB, Op), row)],
        ),
        compiler_params=pltpu.CompilerParams(
            dimension_semantics=("parallel",)),
    )(xp, w1p, b1p, w2p, b2p, w3m, b3m, w3l, b3l)

    # Slices start at lane 0 / row 0, so they are cheap, aligned copies.
    return mu_pad[:B, :half], lv_pad[:B, :half]


def init_message_encoder_params(key, n_latents, hidden_dim):
    """Deterministic init mirroring the torch module:
    - weights: xavier_uniform (via init_weights)
    - biases: torch Linear default U(-1/sqrt(fan_in), 1/sqrt(fan_in))
    Weights are stored transposed as (in, out)."""
    def xavier(k, fan_in, fan_out):
        bound = math.sqrt(6.0 / (fan_in + fan_out))
        return jax.random.uniform(k, (fan_in, fan_out), jnp.float32, -bound, bound)

    def bias(k, fan_in, fan_out):
        bound = 1.0 / math.sqrt(fan_in)
        return jax.random.uniform(k, (1, fan_out), jnp.float32, -bound, bound)

    ks = jax.random.split(key, 6)
    out_dim = n_latents * 2 * 2
    w1 = xavier(ks[0], 2, hidden_dim)
    b1 = bias(ks[1], 2, hidden_dim)
    w2 = xavier(ks[2], hidden_dim, hidden_dim)
    b2 = bias(ks[3], hidden_dim, hidden_dim)
    w3 = xavier(ks[4], hidden_dim, out_dim)
    b3 = bias(ks[5], hidden_dim, out_dim)
    return (w1, b1, w2, b2, w3, b3)


def _reference_forward(x, params, n_latents):
    w1, b1, w2, b2, w3, b3 = params
    h = x.astype(jnp.float32) @ w1 + b1
    h = h * jax.nn.sigmoid(h)
    h = h @ w2 + b2
    h = h * jax.nn.sigmoid(h)
    y = h @ w3 + b3
    split = 2 * n_latents
    return y[:, :split], y[:, split:]


if __name__ == "__main__":
    n_latents = 4
    hidden_dim = 32
    batch = 8

    key = jax.random.PRNGKey(0)
    k_params, k_x = jax.random.split(key)
    params = init_message_encoder_params(k_params, n_latents, hidden_dim)

    # input is a pair of scalars per example -> shape (batch, 2), like Linear(2, H)
    x = jax.random.normal(k_x, (batch, 2), dtype=jnp.float32)

    mu, logvar = message_encoder_forward(x, params, n_latents)
    jax.block_until_ready((mu, logvar))

    # sanity check against plain-JAX reference (approx reciprocal in the kernel
    # -> slightly looser tolerance than exact sigmoid)
    mu_ref, logvar_ref = _reference_forward(x, params, n_latents)
    assert mu.shape == (batch, 2 * n_latents)
    assert logvar.shape == (batch, 2 * n_latents)
    assert jnp.allclose(mu, mu_ref, atol=2e-3, rtol=2e-3)
    assert jnp.allclose(logvar, logvar_ref, atol=2e-3, rtol=2e-3)

    print("KERNEL_OK")
</pallas_src>

<mosaic_0001>
module attributes {stable_mosaic.version = 11 : i64} {
  func.func @_mlp_kernel(%arg0: i32, %arg1: memref<8x2xf32, #tpu.memory_space<vmem>>, %arg2: memref<2x128xf32, #tpu.memory_space<vmem>>, %arg3: memref<1x128xf32, #tpu.memory_space<vmem>>, %arg4: memref<128x128xf32, #tpu.memory_space<vmem>>, %arg5: memref<1x128xf32, #tpu.memory_space<vmem>>, %arg6: memref<128x128xf32, #tpu.memory_space<vmem>>, %arg7: memref<1x128xf32, #tpu.memory_space<vmem>>, %arg8: memref<128x128xf32, #tpu.memory_space<vmem>>, %arg9: memref<1x128xf32, #tpu.memory_space<vmem>>, %arg10: memref<8x128xf32, #tpu.memory_space<vmem>>, %arg11: memref<8x128xf32, #tpu.memory_space<vmem>>) attributes {dimension_semantics = [#tpu.dimension_semantics<parallel>], iteration_bounds = array<i64: 1>, scalar_prefetch = 0 : i64, scratch_operands = 0 : i64, tpu.core_type = #tpu.core_type<tc>, window_params = [{transform_indices = @transform_0, window_bounds = array<i64: 8, 2>}, {pipeline_mode = #tpu.pipeline_mode<synchronous>, transform_indices = @transform_1, window_bounds = array<i64: 2, 128>}, {pipeline_mode = #tpu.pipeline_mode<synchronous>, transform_indices = @transform_2, window_bounds = array<i64: 1, 128>}, {pipeline_mode = #tpu.pipeline_mode<synchronous>, transform_indices = @transform_3, window_bounds = array<i64: 128, 128>}, {pipeline_mode = #tpu.pipeline_mode<synchronous>, transform_indices = @transform_4, window_bounds = array<i64: 1, 128>}, {pipeline_mode = #tpu.pipeline_mode<synchronous>, transform_indices = @transform_5, window_bounds = array<i64: 128, 128>}, {pipeline_mode = #tpu.pipeline_mode<synchronous>, transform_indices = @transform_6, window_bounds = array<i64: 1, 128>}, {pipeline_mode = #tpu.pipeline_mode<synchronous>, transform_indices = @transform_7, window_bounds = array<i64: 128, 128>}, {pipeline_mode = #tpu.pipeline_mode<synchronous>, transform_indices = @transform_8, window_bounds = array<i64: 1, 128>}, {transform_indices = @transform_9, window_bounds = array<i64: 8, 128>}, {transform_indices = @transform_10, window_bounds = array<i64: 8, 128>}]} {
    %c0 = arith.constant 0 : index
    %c0_0 = arith.constant 0 : index
    %0 = vector.load %arg1[%c0, %c0_0] : memref<8x2xf32, #tpu.memory_space<vmem>>, vector<8x2xf32>
    %1 = vector.extract_strided_slice %0 {offsets = [0, 0], sizes = [8, 1], strides = [1, 1]} : vector<8x2xf32> to vector<8x1xf32>
    %c0_1 = arith.constant 0 : index
    %c0_2 = arith.constant 0 : index
    %2 = vector.load %arg2[%c0_1, %c0_2] : memref<2x128xf32, #tpu.memory_space<vmem>>, vector<1x128xf32>
    %3 = vector.broadcast %1 : vector<8x1xf32> to vector<8x128xf32>
    %4 = vector.broadcast %2 : vector<1x128xf32> to vector<8x128xf32>
    %5 = arith.mulf %3, %4 : vector<8x128xf32>
    %6 = vector.extract_strided_slice %0 {offsets = [0, 1], sizes = [8, 1], strides = [1, 1]} : vector<8x2xf32> to vector<8x1xf32>
    %c1 = arith.constant 1 : index
    %c0_3 = arith.constant 0 : index
    %7 = vector.load %arg2[%c1, %c0_3] : memref<2x128xf32, #tpu.memory_space<vmem>>, vector<1x128xf32>
    %8 = vector.broadcast %6 : vector<8x1xf32> to vector<8x128xf32>
    %9 = vector.broadcast %7 : vector<1x128xf32> to vector<8x128xf32>
    %10 = arith.mulf %8, %9 : vector<8x128xf32>
    %11 = arith.addf %5, %10 : vector<8x128xf32>
    %c0_4 = arith.constant 0 : index
    %c0_5 = arith.constant 0 : index
    %12 = vector.load %arg3[%c0_4, %c0_5] : memref<1x128xf32, #tpu.memory_space<vmem>>, vector<1x128xf32>
    %13 = vector.broadcast %12 : vector<1x128xf32> to vector<8x128xf32>
    %14 = arith.addf %11, %13 : vector<8x128xf32>
    %cst = arith.constant 0.000000e+00 : f32
    %15 = vector.broadcast %cst : f32 to vector<8x128xf32>
    %16 = arith.subf %15, %14 : vector<8x128xf32>
    %17 = math.exp %16 : vector<8x128xf32>
    %cst_6 = arith.constant 1.000000e+00 : f32
    %18 = vector.broadcast %cst_6 : f32 to vector<8x128xf32>
    %19 = arith.addf %18, %17 : vector<8x128xf32>
    %20 = tpu.reciprocal %19 {approx = true} : vector<8x128xf32> -> vector<8x128xf32>
    %21 = arith.mulf %14, %20 : vector<8x128xf32>
    %c0_7 = arith.constant 0 : index
    %c0_8 = arith.constant 0 : index
    %22 = vector.load %arg4[%c0_7, %c0_8] : memref<128x128xf32, #tpu.memory_space<vmem>>, vector<128x128xf32>
    %cst_9 = arith.constant dense<0.000000e+00> : vector<8x128xf32>
    %23 = tpu.matmul %21, %22, %cst_9 {dimension_numbers = #tpu.dot_dimension_numbers<[1], [0], [0], [1], [0, 0, 1, 1], [], []>} : vector<8x128xf32>, vector<128x128xf32>, vector<8x128xf32> -> vector<8x128xf32>
    %c0_10 = arith.constant 0 : index
    %c0_11 = arith.constant 0 : index
    %24 = vector.load %arg5[%c0_10, %c0_11] : memref<1x128xf32, #tpu.memory_space<vmem>>, vector<1x128xf32>
    %25 = vector.broadcast %24 : vector<1x128xf32> to vector<8x128xf32>
    %26 = arith.addf %23, %25 : vector<8x128xf32>
    %cst_12 = arith.constant 0.000000e+00 : f32
    %27 = vector.broadcast %cst_12 : f32 to vector<8x128xf32>
    %28 = arith.subf %27, %26 : vector<8x128xf32>
    %29 = math.exp %28 : vector<8x128xf32>
    %cst_13 = arith.constant 1.000000e+00 : f32
    %30 = vector.broadcast %cst_13 : f32 to vector<8x128xf32>
    %31 = arith.addf %30, %29 : vector<8x128xf32>
    %32 = tpu.reciprocal %31 {approx = true} : vector<8x128xf32> -> vector<8x128xf32>
    %33 = arith.mulf %26, %32 : vector<8x128xf32>
    %c0_14 = arith.constant 0 : index
    %c0_15 = arith.constant 0 : index
    %34 = vector.load %arg6[%c0_14, %c0_15] : memref<128x128xf32, #tpu.memory_space<vmem>>, vector<128x128xf32>
    %cst_16 = arith.constant dense<0.000000e+00> : vector<8x128xf32>
    %35 = tpu.matmul %33, %34, %cst_16 {dimension_numbers = #tpu.dot_dimension_numbers<[1], [0], [0], [1], [0, 0, 1, 1], [], []>} : vector<8x128xf32>, vector<128x128xf32>, vector<8x128xf32> -> vector<8x128xf32>
    %c0_17 = arith.constant 0 : index
    %c0_18 = arith.constant 0 : index
    %36 = vector.load %arg7[%c0_17, %c0_18] : memref<1x128xf32, #tpu.memory_space<vmem>>, vector<1x128xf32>
    %37 = vector.broadcast %36 : vector<1x128xf32> to vector<8x128xf32>
    %38 = arith.addf %35, %37 : vector<8x128xf32>
    %c0_19 = arith.constant 0 : index
    %c0_20 = arith.constant 0 : index
    %39 = vector.load %arg10[%c0_19, %c0_20] : memref<8x128xf32, #tpu.memory_space<vmem>>, vector<8x128xf32>
    tpu.vector_store %arg10[%c0_19, %c0_20], %38 {strides = array<i32>} : memref<8x128xf32, #tpu.memory_space<vmem>>, vector<8x128xf32>,
    %c0_21 = arith.constant 0 : index
    %c0_22 = arith.constant 0 : index
    %40 = vector.load %arg8[%c0_21, %c0_22] : memref<128x128xf32, #tpu.memory_space<vmem>>, vector<128x128xf32>
    %cst_23 = arith.constant dense<0.000000e+00> : vector<8x128xf32>
    %41 = tpu.matmul %33, %40, %cst_23 {dimension_numbers = #tpu.dot_dimension_numbers<[1], [0], [0], [1], [0, 0, 1, 1], [], []>} : vector<8x128xf32>, vector<128x128xf32>, vector<8x128xf32> -> vector<8x128xf32>
    %c0_24 = arith.constant 0 : index
    %c0_25 = arith.constant 0 : index
    %42 = vector.load %arg9[%c0_24, %c0_25] : memref<1x128xf32, #tpu.memory_space<vmem>>, vector<1x128xf32>
    %43 = vector.broadcast %42 : vector<1x128xf32> to vector<8x128xf32>
    %44 = arith.addf %41, %43 : vector<8x128xf32>
    %c0_26 = arith.constant 0 : index
    %c0_27 = arith.constant 0 : index
    %45 = vector.load %arg11[%c0_26, %c0_27] : memref<8x128xf32, #tpu.memory_space<vmem>>, vector<8x128xf32>
    tpu.vector_store %arg11[%c0_26, %c0_27], %44 {strides = array<i32>} : memref<8x128xf32, #tpu.memory_space<vmem>>, vector<8x128xf32>,
    return
  }
  func.func @transform_0(%arg0: i32) -> (i32, i32) {
    %c0_i32 = arith.constant 0 : i32
    %c0_i32_0 = arith.constant 0 : i32
    return %arg0, %c0_i32 : i32, i32
  }
  func.func @transform_1(%arg0: i32) -> (i32, i32) {
    %c0_i32 = arith.constant 0 : i32
    %c0_i32_0 = arith.constant 0 : i32
    %c0_i32_1 = arith.constant 0 : i32
    return %c0_i32, %c0_i32_0 : i32, i32
  }
  func.func @transform_2(%arg0: i32) -> (i32, i32) {
    %c0_i32 = arith.constant 0 : i32
    %c0_i32_0 = arith.constant 0 : i32
    %c0_i32_1 = arith.constant 0 : i32
    return %c0_i32, %c0_i32_0 : i32, i32
  }
  func.func @transform_3(%arg0: i32) -> (i32, i32) {
    %c0_i32 = arith.constant 0 : i32
    %c0_i32_0 = arith.constant 0 : i32
    %c0_i32_1 = arith.constant 0 : i32
    return %c0_i32, %c0_i32_0 : i32, i32
  }
  func.func @transform_4(%arg0: i32) -> (i32, i32) {
    %c0_i32 = arith.constant 0 : i32
    %c0_i32_0 = arith.constant 0 : i32
    %c0_i32_1 = arith.constant 0 : i32
    return %c0_i32, %c0_i32_0 : i32, i32
  }
  func.func @transform_5(%arg0: i32) -> (i32, i32) {
    %c0_i32 = arith.constant 0 : i32
    %c0_i32_0 = arith.constant 0 : i32
    %c0_i32_1 = arith.constant 0 : i32
    return %c0_i32, %c0_i32_0 : i32, i32
  }
  func.func @transform_6(%arg0: i32) -> (i32, i32) {
    %c0_i32 = arith.constant 0 : i32
    %c0_i32_0 = arith.constant 0 : i32
    %c0_i32_1 = arith.constant 0 : i32
    return %c0_i32, %c0_i32_0 : i32, i32
  }
  func.func @transform_7(%arg0: i32) -> (i32, i32) {
    %c0_i32 = arith.constant 0 : i32
    %c0_i32_0 = arith.constant 0 : i32
    %c0_i32_1 = arith.constant 0 : i32
    return %c0_i32, %c0_i32_0 : i32, i32
  }
  func.func @transform_8(%arg0: i32) -> (i32, i32) {
    %c0_i32 = arith.constant 0 : i32
    %c0_i32_0 = arith.constant 0 : i32
    %c0_i32_1 = arith.constant 0 : i32
    return %c0_i32, %c0_i32_0 : i32, i32
  }
  func.func @transform_9(%arg0: i32) -> (i32, i32) {
    %c0_i32 = arith.constant 0 : i32
    %c0_i32_0 = arith.constant 0 : i32
    return %arg0, %c0_i32 : i32, i32
  }
  func.func @transform_10(%arg0: i32) -> (i32, i32) {
    %c0_i32 = arith.constant 0 : i32
    %c0_i32_0 = arith.constant 0 : i32
    return %arg0, %c0_i32 : i32, i32
  }
}

</mosaic_0001>

<llo_original>
// kernel: tpu_custom_call.1
$region0: #{tpu_custom_call.1}
  #allocation0 [shape = 'u32[]', space=smem, size = 0x4, offset = 0x4, fixed_abs, tag = 'smem constant byte address 0x4 - core index']
  #allocation1 [shape = 'u32[144,128]{1,0:T(1,128)}', space=vmem, size = 0x12000, scoped, tag = 'internal scratch']
  %s0 = inlined_call_operand.vmem [shape: f32[8,2], index: 0, kind: input, shape index: {}]
  %s1 = inlined_call_operand.vmem [shape: f32[2,128], index: 1, kind: input, shape index: {}]
  %s2 = inlined_call_operand.vmem [shape: f32[1,128], index: 2, kind: input, shape index: {}]
  %s3 = inlined_call_operand.hbm [shape: f32[128,128], index: 3, kind: input, shape index: {}]
  %s4 = inlined_call_operand.vmem [shape: f32[1,128], index: 4, kind: input, shape index: {}]
  %s5 = inlined_call_operand.hbm [shape: f32[128,128], index: 5, kind: input, shape index: {}]
  %s6 = inlined_call_operand.vmem [shape: f32[1,128], index: 6, kind: input, shape index: {}]
  %s7 = inlined_call_operand.hbm [shape: f32[128,128], index: 7, kind: input, shape index: {}]
  %s8 = inlined_call_operand.vmem [shape: f32[1,128], index: 8, kind: input, shape index: {}]
  %s9 = inlined_call_operand.hbm [shape: f32[8,128], index: 9, kind: output, shape index: {0}]
  %s10 = inlined_call_operand.hbm [shape: f32[8,128], index: 10, kind: output, shape index: {1}]
  %11 = xla_tuple %s9, %s10
  %s12 = sld [smem:[#allocation0]]
  $region66: #{tpu_custom_call.1} parent=0
    _
  %s14 = ssub.s32 1, %s12
  %s15 = scalar_select 0, %s14, %s12
  $region1: #{tpu_custom_call.1} parent=0
    #allocation2 [shape = 'u8[65536]{0}', space=vmem, size = 0x10000, scoped, tag = 'input window, operand 3, single buffered']
    #allocation3 [shape = 's32[1]{0}', space=sflag, size = 0x4, scoped, tag = 'scoped memory for tpu_custom_call.1']
    #allocation4 [shape = 's32[1]{0}', space=sflag, size = 0x4, scoped, tag = 'scoped memory for tpu_custom_call.1']
    #allocation5 [shape = 'u8[65536]{0}', space=vmem, size = 0x10000, scoped, tag = 'input window, operand 5, single buffered']
    #allocation6 [shape = 's32[1]{0}', space=sflag, size = 0x4, scoped, tag = 'scoped memory for tpu_custom_call.1']
    #allocation7 [shape = 'u8[65536]{0}', space=vmem, size = 0x10000, scoped, tag = 'input window, operand 7, single buffered']
    #allocation8 [shape = 'u8[4096]{0}', space=vmem, size = 0x1000, scoped, tag = 'output window, operand 0, single buffered']
    #allocation9 [shape = 'u8[4096]{0}', space=vmem, size = 0x1000, scoped, tag = 'output window, operand 1, single buffered']
    #allocation10 [shape = 's32[1]{0}', space=sflag, size = 0x4, scoped, tag = 'scoped memory for tpu_custom_call.1']
    %16 = vsyncpa [#allocation3], 0
    %17 = vsyncpa [#allocation6], 0
    %18 = vsyncpa [#allocation4], 0
    %19 = vsyncpa [#allocation10], 0
    // Predicated region
    $region2: #{tpu_custom_call.1} parent=1 // pred_check
      _
    $region3: #{tpu_custom_call.1} parent=1 // pred_check_branch
      %21 = sbr.rel (0) target = $region5
    $region4: #{tpu_custom_call.1} parent=1 // pred_region
      _
    $region5: #{tpu_custom_call.1} parent=1 // pred_fallthru
      _
    // Predicated region
    $region6: #{tpu_custom_call.1} parent=1 // pred_check
      _
    $region7: #{tpu_custom_call.1} parent=1 // pred_check_branch
      %23 = sbr.rel (0) target = $region9
    $region8: #{tpu_custom_call.1} parent=1 // pred_region
      _
    $region9: #{tpu_custom_call.1} parent=1 // pred_fallthru
      _
    // Predicated region
    $region10: #{tpu_custom_call.1} parent=1 // pred_check
      _
    $region11: #{tpu_custom_call.1} parent=1 // pred_check_branch
      %25 = sbr.rel (0) target = $region13
    $region12: #{tpu_custom_call.1} parent=1 // pred_region
      _
    $region13: #{tpu_custom_call.1} parent=1 // pred_fallthru
      _
    // Predicated region
    $region14: #{tpu_custom_call.1} parent=1 // pred_check
      _
    $region15: #{tpu_custom_call.1} parent=1 // pred_check_branch
      %27 = sbr.rel (0) target = $region17
    $region16: #{tpu_custom_call.1} parent=1 // pred_region
      %s29 = ssub.s32 2048, 2048
      %30 = vsyncadd [#allocation3], %s29
      %s31 = sshll.u32 [#allocation2], 4
      %s32 = int_to_ptr.vmem [resolvable:$true] %s31
      %37 = dma.hbm_to_vmem [thread:$0]  %s3, 2048, %s32, [#allocation3], 128, 128, 8
    $region17: #{tpu_custom_call.1} parent=1 // pred_fallthru
      _
    // Predicated region
    $region18: #{tpu_custom_call.1} parent=1 // pred_check
      _
    $region19: #{tpu_custom_call.1} parent=1 // pred_check_branch
      %39 = sbr.rel (0) target = $region21
    $region20: #{tpu_custom_call.1} parent=1 // pred_region
      _
    $region21: #{tpu_custom_call.1} parent=1 // pred_fallthru
      _
    // Predicated region
    $region22: #{tpu_custom_call.1} parent=1 // pred_check
      _
    $region23: #{tpu_custom_call.1} parent=1 // pred_check_branch
      %41 = sbr.rel (0) target = $region25
    $region24: #{tpu_custom_call.1} parent=1 // pred_region
      %s43 = ssub.s32 2048, 2048
      %44 = vsyncadd [#allocation6], %s43
      %s45 = sshll.u32 [#allocation5], 4
      %s46 = int_to_ptr.vmem [resolvable:$true] %s45
      %51 = dma.hbm_to_vmem [thread:$0]  %s5, 2048, %s46, [#allocation6], 128, 128, 8
    $region25: #{tpu_custom_call.1} parent=1 // pred_fallthru
      _
    // Predicated region
    $region26: #{tpu_custom_call.1} parent=1 // pred_check
      _
    $region27: #{tpu_custom_call.1} parent=1 // pred_check_branch
      %53 = sbr.rel (0) target = $region29
    $region28: #{tpu_custom_call.1} parent=1 // pred_region
      _
    $region29: #{tpu_custom_call.1} parent=1 // pred_fallthru
      _
    // Predicated region
    $region30: #{tpu_custom_call.1} parent=1 // pred_check
      _
    $region31: #{tpu_custom_call.1} parent=1 // pred_check_branch
      %55 = sbr.rel (0) target = $region33
    $region32: #{tpu_custom_call.1} parent=1 // pred_region
      %s57 = ssub.s32 2048, 2048
      %58 = vsyncadd [#allocation6], %s57
      %s59 = sshll.u32 [#allocation7], 4
      %s60 = int_to_ptr.vmem [resolvable:$true] %s59
      %65 = dma.hbm_to_vmem [thread:$0]  %s7, 2048, %s60, [#allocation6], 128, 128, 8
    $region33: #{tpu_custom_call.1} parent=1 // pred_fallthru
      _
    // Predicated region
    $region34: #{tpu_custom_call.1} parent=1 // pred_check
      _
    $region35: #{tpu_custom_call.1} parent=1 // pred_check_branch
      %67 = sbr.rel (0) target = $region37
    $region36: #{tpu_custom_call.1} parent=1 // pred_region
      _
    $region37: #{tpu_custom_call.1} parent=1 // pred_fallthru
      _
    // Predicated region
    $region38: #{tpu_custom_call.1} parent=1 // pred_check
      _
    $region39: #{tpu_custom_call.1} parent=1 // pred_check_branch
      %69 = sbr.rel (0) target = $region41
    $region40: #{tpu_custom_call.1} parent=1 // pred_region
      %70 = dma.done [#allocation3], 2048
    $region41: #{tpu_custom_call.1} parent=1 // pred_fallthru
      _
    // Predicated region
    $region42: #{tpu_custom_call.1} parent=1 // pred_check
      _
    $region43: #{tpu_custom_call.1} parent=1 // pred_check_branch
      %72 = sbr.rel (0) target = $region45
    $region44: #{tpu_custom_call.1} parent=1 // pred_region
      %73 = dma.done [#allocation6], 2048
    $region45: #{tpu_custom_call.1} parent=1 // pred_fallthru
      _
    // Predicated region
    $region46: #{tpu_custom_call.1} parent=1 // pred_check
      _
    $region47: #{tpu_custom_call.1} parent=1 // pred_check_branch
      %75 = sbr.rel (0) target = $region49
    $region48: #{tpu_custom_call.1} parent=1 // pred_region
      %76 = dma.done [#allocation6], 2048
    $region49: #{tpu_custom_call.1} parent=1 // pred_fallthru
      _
    %v77 = vld [vmem:[%s0] sm:$0xff]
    %v78 = vld [vmem:[%s1] sm:$0x1]
    %80 = vset.pattern.permute.xlu0 0
    %81 = vperm.xlu0 %80, %v77
    %v82 = vpop.permute.xlu0 %81
    %v84 = vlaneseq
    %v85 = vshrl.u32 %v84, 7
    %v86 = vsub.s32 0, %v85
    %v87 = vrot.slane %v78, %v86
    %v88 = vmul.f32 %v82, %v87
    %v89 = vld [vmem:[%s1 + $0x1] sm:$0x1]
    %90 = vset.pattern.permute.xlu0 1
    %91 = vperm.xlu0 %90, %v77
    %v92 = vpop.permute.xlu0 %91
    %v94 = vlaneseq
    %v95 = vshrl.u32 %v94, 7
    %v96 = vsub.s32 0, %v95
    %v97 = vrot.slane %v89, %v96
    %v98 = vmul.f32 %v92, %v97
    %v99 = vadd.f32 %v88, %v98
    %v100 = vld [vmem:[%s2] sm:$0x1]
    %v102 = vlaneseq
    %v103 = vshrl.u32 %v102, 7
    %v104 = vsub.s32 0, %v103
    %v105 = vrot.slane %v100, %v104
    %v107 = vadd.f32 %v99, %v105
    %v108 = vsub.f32 0.0, %v107
    %v109 = vmul.f32 %v108, 1.442695
    %v110 = vpow.pop %v109
    %v111 = vadd.f32 %v110, 1.0
    %v112 = vrcp.pop %v111
    %v113 = vmul.f32 %v107, %v112
    %v114 = vld [vmem:[#allocation2] sm:$0xff]
    %v115 = vld [vmem:[#allocation2 + $0x8] sm:$0xff]
    %v116 = vld [vmem:[#allocation2 + $0x10] sm:$0xff]
    %v117 = vld [vmem:[#allocation2 + $0x18] sm:$0xff]
    %v118 = vld [vmem:[#allocation2 + $0x20] sm:$0xff]
    %v119 = vld [vmem:[#allocation2 + $0x28] sm:$0xff]
    %v120 = vld [vmem:[#allocation2 + $0x30] sm:$0xff]
    %v121 = vld [vmem:[#allocation2 + $0x38] sm:$0xff]
    %v122 = vld [vmem:[#allocation2 + $0x40] sm:$0xff]
    %v123 = vld [vmem:[#allocation2 + $0x48] sm:$0xff]
    %v124 = vld [vmem:[#allocation2 + $0x50] sm:$0xff]
    %v125 = vld [vmem:[#allocation2 + $0x58] sm:$0xff]
    %v126 = vld [vmem:[#allocation2 + $0x60] sm:$0xff]
    %v127 = vld [vmem:[#allocation2 + $0x68] sm:$0xff]
    %v128 = vld [vmem:[#allocation2 + $0x70] sm:$0xff]
    %v129 = vld [vmem:[#allocation2 + $0x78] sm:$0xff]
    %v130 = vld [vmem:[%s4] sm:$0x1]
    %v132 = vlaneseq
    %v133 = vshrl.u32 %v132, 7
    %v134 = vsub.s32 0, %v133
    %v135 = vrot.slane %v130, %v134
    %137 = vmatprep.subr.mxu0 0.0
    %138 = vmatpush1.msra.mxu0 %v114
    %139 = vmatprep.subr.mxu0 0.0
    %140 = vmatpush1.msra.mxu0 %v115
    %141 = vmatprep.subr.mxu0 0.0
    %142 = vmatpush1.msra.mxu0 %v116
    %143 = vmatprep.subr.mxu0 0.0
    %144 = vmatpush1.msra.mxu0 %v117
    %145 = vmatprep.subr.mxu0 0.0
    %146 = vmatpush1.msra.mxu0 %v118
    %147 = vmatprep.subr.mxu0 0.0
    %148 = vmatpush1.msra.mxu0 %v119
    %149 = vmatprep.subr.mxu0 0.0
    %150 = vmatpush1.msra.mxu0 %v120
    %151 = vmatprep.subr.mxu0 0.0
    %152 = vmatpush1.msra.mxu0 %v121
    %153 = vmatprep.subr.mxu0 0.0
    %154 = vmatpush1.msra.mxu0 %v122
    %155 = vmatprep.subr.mxu0 0.0
    %156 = vmatpush1.msra.mxu0 %v123
    %157 = vmatprep.subr.mxu0 0.0
    %158 = vmatpush1.msra.mxu0 %v124
    %159 = vmatprep.subr.mxu0 0.0
    %160 = vmatpush1.msra.mxu0 %v125
    %161 = vmatprep.subr.mxu0 0.0
    %162 = vmatpush1.msra.mxu0 %v126
    %163 = vmatprep.subr.mxu0 0.0
    %164 = vmatpush1.msra.mxu0 %v127
    %165 = vmatprep.subr.mxu0 0.0
    %166 = vmatpush1.msra.mxu0 %v128
    %167 = vmatprep.subr.mxu0 0.0
    %168 = vmatpush1.msra.mxu0 %v129
    %169 = vmatprep.subr.mxu0 0.0
    %170 = vmatpush1.msra.mxu0 0.0
    %171 = vmatprep.subr.mxu0 0.0
    %172 = vmatpush1.msra.mxu0 0.0
    %173 = vmatprep.subr.mxu0 0.0
    %174 = vmatpush1.msra.mxu0 0.0
    %175 = vmatprep.subr.mxu0 0.0
    %176 = vmatpush1.msra.mxu0 0.0
    %177 = vmatprep.subr.mxu0 0.0
    %178 = vmatpush1.msra.mxu0 0.0
    %179 = vmatprep.subr.mxu0 0.0
    %180 = vmatpush1.msra.mxu0 0.0
    %181 = vmatprep.subr.mxu0 0.0
    %182 = vmatpush1.msra.mxu0 0.0
    %183 = vmatprep.subr.mxu0 0.0
    %184 = vmatpush1.msra.mxu0 0.0
    %185 = vmatprep.subr.mxu0 0.0
    %186 = vmatpush1.msra.mxu0 0.0
    %187 = vmatprep.subr.mxu0 0.0
    %188 = vmatpush1.msra.mxu0 0.0
    %189 = vmatprep.subr.mxu0 0.0
    %190 = vmatpush1.msra.mxu0 0.0
    %191 = vmatprep.subr.mxu0 0.0
    %192 = vmatpush1.msra.mxu0 0.0
    %193 = vmatprep.subr.mxu0 0.0
    %194 = vmatpush1.msra.mxu0 0.0
    %195 = vmatprep.subr.mxu0 0.0
    %196 = vmatpush1.msra.mxu0 0.0
    %197 = vmatprep.subr.mxu0 0.0
    %198 = vmatpush1.msra.mxu0 0.0
    %199 = vmatprep.subr.mxu0 0.0
    %200 = vmatpush1.msra.mxu0 0.0
    %201 = vmatprep.mubr.f32.mxu0 0.0
    %202 = vmatmul.mubr.f32.gmra.mrb[0].mxu0 %v113
    %v203 = vpop.f32.mrb[0].mxu0
    %v204 = vadd.f32 %v135, %v203
    %v205 = vpop.f32.mrb[0].mxu0
    %206 = vdwg.mxu0
    %v207 = vsub.f32 0.0, %v204
    %v208 = vmul.f32 %v207, 1.442695
    %v209 = vpow.pop %v208
    %v210 = vadd.f32 %v209, 1.0
    %v211 = vrcp.pop %v210
    %v212 = vmul.f32 %v204, %v211
    %v213 = vld [vmem:[#allocation5] sm:$0xff]
    %v214 = vld [vmem:[#allocation5 + $0x8] sm:$0xff]
    %v215 = vld [vmem:[#allocation5 + $0x10] sm:$0xff]
    %v216 = vld [vmem:[#allocation5 + $0x18] sm:$0xff]
    %v217 = vld [vmem:[#allocation5 + $0x20] sm:$0xff]
    %v218 = vld [vmem:[#allocation5 + $0x28] sm:$0xff]
    %v219 = vld [vmem:[#allocation5 + $0x30] sm:$0xff]
    %v220 = vld [vmem:[#allocation5 + $0x38] sm:$0xff]
    %v221 = vld [vmem:[#allocation5 + $0x40] sm:$0xff]
    %v222 = vld [vmem:[#allocation5 + $0x48] sm:$0xff]
    %v223 = vld [vmem:[#allocation5 + $0x50] sm:$0xff]
    %v224 = vld [vmem:[#allocation5 + $0x58] sm:$0xff]
    %v225 = vld [vmem:[#allocation5 + $0x60] sm:$0xff]
    %v226 = vld [vmem:[#allocation5 + $0x68] sm:$0xff]
    %v227 = vld [vmem:[#allocation5 + $0x70] sm:$0xff]
    %v228 = vld [vmem:[#allocation5 + $0x78] sm:$0xff]
    %v229 = vld [vmem:[%s6] sm:$0x1]
    %v231 = vlaneseq
    %v232 = vshrl.u32 %v231, 7
    %v233 = vsub.s32 0, %v232
    %v234 = vrot.slane %v229, %v233
    %236 = vmatprep.subr.mxu0 0.0
    %237 = vmatpush1.msra.mxu0 %v213
    %238 = vmatprep.subr.mxu0 0.0
    %239 = vmatpush1.msra.mxu0 %v214
    %240 = vmatprep.subr.mxu0 0.0
    %241 = vmatpush1.msra.mxu0 %v215
    %242 = vmatprep.subr.mxu0 0.0
    %243 = vmatpush1.msra.mxu0 %v216
    %244 = vmatprep.subr.mxu0 0.0
    %245 = vmatpush1.msra.mxu0 %v217
    %246 = vmatprep.subr.mxu0 0.0
    %247 = vmatpush1.msra.mxu0 %v218
    %248 = vmatprep.subr.mxu0 0.0
    %249 = vmatpush1.msra.mxu0 %v219
    %250 = vmatprep.subr.mxu0 0.0
    %251 = vmatpush1.msra.mxu0 %v220
    %252 = vmatprep.subr.mxu0 0.0
    %253 = vmatpush1.msra.mxu0 %v221
    %254 = vmatprep.subr.mxu0 0.0
    %255 = vmatpush1.msra.mxu0 %v222
    %256 = vmatprep.subr.mxu0 0.0
    %257 = vmatpush1.msra.mxu0 %v223
    %258 = vmatprep.subr.mxu0 0.0
    %259 = vmatpush1.msra.mxu0 %v224
    %260 = vmatprep.subr.mxu0 0.0
    %261 = vmatpush1.msra.mxu0 %v225
    %262 = vmatprep.subr.mxu0 0.0
    %263 = vmatpush1.msra.mxu0 %v226
    %264 = vmatprep.subr.mxu0 0.0
    %265 = vmatpush1.msra.mxu0 %v227
    %266 = vmatprep.subr.mxu0 0.0
    %267 = vmatpush1.msra.mxu0 %v228
    %268 = vmatprep.subr.mxu0 0.0
    %269 = vmatpush1.msra.mxu0 0.0
    %270 = vmatprep.subr.mxu0 0.0
    %271 = vmatpush1.msra.mxu0 0.0
    %272 = vmatprep.subr.mxu0 0.0
    %273 = vmatpush1.msra.mxu0 0.0
    %274 = vmatprep.subr.mxu0 0.0
    %275 = vmatpush1.msra.mxu0 0.0
    %276 = vmatprep.subr.mxu0 0.0
    %277 = vmatpush1.msra.mxu0 0.0
    %278 = vmatprep.subr.mxu0 0.0
    %279 = vmatpush1.msra.mxu0 0.0
    %280 = vmatprep.subr.mxu0 0.0
    %281 = vmatpush1.msra.mxu0 0.0
    %282 = vmatprep.subr.mxu0 0.0
    %283 = vmatpush1.msra.mxu0 0.0
    %284 = vmatprep.subr.mxu0 0.0
    %285 = vmatpush1.msra.mxu0 0.0
    %286 = vmatprep.subr.mxu0 0.0
    %287 = vmatpush1.msra.mxu0 0.0
    %288 = vmatprep.subr.mxu0 0.0
    %289 = vmatpush1.msra.mxu0 0.0
    %290 = vmatprep.subr.mxu0 0.0
    %291 = vmatpush1.msra.mxu0 0.0
    %292 = vmatprep.subr.mxu0 0.0
    %293 = vmatpush1.msra.mxu0 0.0
    %294 = vmatprep.subr.mxu0 0.0
    %295 = vmatpush1.msra.mxu0 0.0
    %296 = vmatprep.subr.mxu0 0.0
    %297 = vmatpush1.msra.mxu0 0.0
    %298 = vmatprep.subr.mxu0 0.0
    %299 = vmatpush1.msra.mxu0 0.0
    %300 = vmatprep.mubr.f32.mxu0 0.0
    %301 = vmatmul.mubr.f32.gmra.mrb[0].mxu0 %v212
    %v302 = vpop.f32.mrb[0].mxu0
    %v303 = vadd.f32 %v234, %v302
    %v304 = vpop.f32.mrb[0].mxu0
    %305 = vdwg.mxu0
    %306 = vst [vmem:[#allocation8] sm:$0xff] %v303
    %v307 = vld [vmem:[#allocation7] sm:$0xff]
    %v308 = vld [vmem:[#allocation7 + $0x8] sm:$0xff]
    %v309 = vld [vmem:[#allocation7 + $0x10] sm:$0xff]
    %v310 = vld [vmem:[#allocation7 + $0x18] sm:$0xff]
    %v311 = vld [vmem:[#allocation7 + $0x20] sm:$0xff]
    %v312 = vld [vmem:[#allocation7 + $0x28] sm:$0xff]
    %v313 = vld [vmem:[#allocation7 + $0x30] sm:$0xff]
    %v314 = vld [vmem:[#allocation7 + $0x38] sm:$0xff]
    %v315 = vld [vmem:[#allocation7 + $0x40] sm:$0xff]
    %v316 = vld [vmem:[#allocation7 + $0x48] sm:$0xff]
    %v317 = vld [vmem:[#allocation7 + $0x50] sm:$0xff]
    %v318 = vld [vmem:[#allocation7 + $0x58] sm:$0xff]
    %v319 = vld [vmem:[#allocation7 + $0x60] sm:$0xff]
    %v320 = vld [vmem:[#allocation7 + $0x68] sm:$0xff]
    %v321 = vld [vmem:[#allocation7 + $0x70] sm:$0xff]
    %v322 = vld [vmem:[#allocation7 + $0x78] sm:$0xff]
    %v323 = vld [vmem:[%s8] sm:$0x1]
    %v325 = vlaneseq
    %v326 = vshrl.u32 %v325, 7
    %v327 = vsub.s32 0, %v326
    %v328 = vrot.slane %v323, %v327
    %330 = vmatprep.subr.mxu0 0.0
    %331 = vmatpush1.msra.mxu0 %v307
    %332 = vmatprep.subr.mxu0 0.0
    %333 = vmatpush1.msra.mxu0 %v308
    %334 = vmatprep.subr.mxu0 0.0
    %335 = vmatpush1.msra.mxu0 %v309
    %336 = vmatprep.subr.mxu0 0.0
    %337 = vmatpush1.msra.mxu0 %v310
    %338 = vmatprep.subr.mxu0 0.0
    %339 = vmatpush1.msra.mxu0 %v311
    %340 = vmatprep.subr.mxu0 0.0
    %341 = vmatpush1.msra.mxu0 %v312
    %342 = vmatprep.subr.mxu0 0.0
    %343 = vmatpush1.msra.mxu0 %v313
    %344 = vmatprep.subr.mxu0 0.0
    %345 = vmatpush1.msra.mxu0 %v314
    %346 = vmatprep.subr.mxu0 0.0
    %347 = vmatpush1.msra.mxu0 %v315
    %348 = vmatprep.subr.mxu0 0.0
    %349 = vmatpush1.msra.mxu0 %v316
    %350 = vmatprep.subr.mxu0 0.0
    %351 = vmatpush1.msra.mxu0 %v317
    %352 = vmatprep.subr.mxu0 0.0
    %353 = vmatpush1.msra.mxu0 %v318
    %354 = vmatprep.subr.mxu0 0.0
    %355 = vmatpush1.msra.mxu0 %v319
    %356 = vmatprep.subr.mxu0 0.0
    %357 = vmatpush1.msra.mxu0 %v320
    %358 = vmatprep.subr.mxu0 0.0
    %359 = vmatpush1.msra.mxu0 %v321
    %360 = vmatprep.subr.mxu0 0.0
    %361 = vmatpush1.msra.mxu0 %v322
    %362 = vmatprep.subr.mxu0 0.0
    %363 = vmatpush1.msra.mxu0 0.0
    %364 = vmatprep.subr.mxu0 0.0
    %365 = vmatpush1.msra.mxu0 0.0
    %366 = vmatprep.subr.mxu0 0.0
    %367 = vmatpush1.msra.mxu0 0.0
    %368 = vmatprep.subr.mxu0 0.0
    %369 = vmatpush1.msra.mxu0 0.0
    %370 = vmatprep.subr.mxu0 0.0
    %371 = vmatpush1.msra.mxu0 0.0
    %372 = vmatprep.subr.mxu0 0.0
    %373 = vmatpush1.msra.mxu0 0.0
    %374 = vmatprep.subr.mxu0 0.0
    %375 = vmatpush1.msra.mxu0 0.0
    %376 = vmatprep.subr.mxu0 0.0
    %377 = vmatpush1.msra.mxu0 0.0
    %378 = vmatprep.subr.mxu0 0.0
    %379 = vmatpush1.msra.mxu0 0.0
    %380 = vmatprep.subr.mxu0 0.0
    %381 = vmatpush1.msra.mxu0 0.0
    %382 = vmatprep.subr.mxu0 0.0
    %383 = vmatpush1.msra.mxu0 0.0
    %384 = vmatprep.subr.mxu0 0.0
    %385 = vmatpush1.msra.mxu0 0.0
    %386 = vmatprep.subr.mxu0 0.0
    %387 = vmatpush1.msra.mxu0 0.0
    %388 = vmatprep.subr.mxu0 0.0
    %389 = vmatpush1.msra.mxu0 0.0
    %390 = vmatprep.subr.mxu0 0.0
    %391 = vmatpush1.msra.mxu0 0.0
    %392 = vmatprep.subr.mxu0 0.0
    %393 = vmatpush1.msra.mxu0 0.0
    %394 = vmatprep.mubr.f32.mxu0 0.0
    %395 = vmatmul.mubr.f32.gmra.mrb[0].mxu0 %v212
    %v396 = vpop.f32.mrb[0].mxu0
    %v397 = vadd.f32 %v328, %v396
    %v398 = vpop.f32.mrb[0].mxu0
    %399 = vdwg.mxu0
    %400 = vst [vmem:[#allocation9] sm:$0xff] %v397
    // Predicated region
    $region50: #{tpu_custom_call.1} parent=1 // pred_check
      _
    $region51: #{tpu_custom_call.1} parent=1 // pred_check_branch
      %402 = sbr.rel (0) target = $region53
    $region52: #{tpu_custom_call.1} parent=1 // pred_region
      %s404 = ssub.s32 128, 128
      %405 = vsyncadd [#allocation4], %s404
      %s407 = sshll.u32 [#allocation8], 4
      %s408 = int_to_ptr.vmem [resolvable:$true] %s407
      %410 = dma.vmem_to_hbm [thread:$0]  %s408, 128, %s9, [#allocation4]
    $region53: #{tpu_custom_call.1} parent=1 // pred_fallthru
      _
    // Predicated region
    $region54: #{tpu_custom_call.1} parent=1 // pred_check
      _
    $region55: #{tpu_custom_call.1} parent=1 // pred_check_branch
      %412 = sbr.rel (0) target = $region57
    $region56: #{tpu_custom_call.1} parent=1 // pred_region
      %s414 = ssub.s32 128, 128
      %415 = vsyncadd [#allocation10], %s414
      %s417 = sshll.u32 [#allocation9], 4
      %s418 = int_to_ptr.vmem [resolvable:$true] %s417
      %420 = dma.vmem_to_hbm [thread:$0]  %s418, 128, %s10, [#allocation10]
    $region57: #{tpu_custom_call.1} parent=1 // pred_fallthru
      _
    // Predicated region
    $region58: #{tpu_custom_call.1} parent=1 // pred_check
      _
    $region59: #{tpu_custom_call.1} parent=1 // pred_check_branch
      %422 = sbr.rel (0) target = $region61
    $region60: #{tpu_custom_call.1} parent=1 // pred_region
      %423 = dma.done [#allocation4], 128
    $region61: #{tpu_custom_call.1} parent=1 // pred_fallthru
      _
    // Predicated region
    $region62: #{tpu_custom_call.1} parent=1 // pred_check
      _
    $region63: #{tpu_custom_call.1} parent=1 // pred_check_branch
      %425 = sbr.rel (0) target = $region65
    $region64: #{tpu_custom_call.1} parent=1 // pred_region
      %426 = dma.done [#allocation10], 128
    $region65: #{tpu_custom_call.1} parent=1 // pred_fallthru
      _
    %427 = vsyncpa [#allocation3], 1
    %428 = vsyncpa [#allocation6], 1
    %429 = vsyncpa [#allocation4], 1
    %430 = vsyncpa [#allocation10], 1

</llo_original>
